<compile_context>
chip_gen: v7x
topology: tpu7x:2x2x1
jax: 0.10.0
libtpu: 0.0.40
codegen_flags: <defaults>
</compile_context>

<pallas_src>
import jax
import jax.numpy as jnp
from jax.experimental import pallas as pl
from jax.experimental.pallas import tpu as pltpu


def _round_up(x: int, m: int) -> int:
    return ((x + m - 1) // m) * m


def _pad2(a, rows: int, cols: int):
    pr, pc = rows - a.shape[0], cols - a.shape[1]
    if pr or pc:
        a = jnp.pad(a, ((0, pr), (0, pc)))
    return a


def _pad1(a, n: int):
    p = n - a.shape[0]
    if p:
        a = jnp.pad(a, (0, p))
    return a


def vq_encoder_kernel(x_ref, w1_ref, b1_ref, w2_ref, b2_ref, o_ref, acc_ref):
    """One (batch-tile, K-tile) grid step of relu(x@W1+b1) @ W2 + b2 > 0."""
    k = pl.program_id(1)

    @pl.when(k == 0)
    def _init():
        acc_ref[...] = jnp.zeros_like(acc_ref)

    # Partial fc1 contraction over this K (vocab) tile: bf16 operands, MXU,
    # f32 accumulation in VMEM scratch.
    acc_ref[...] += jnp.dot(x_ref[...], w1_ref[...],
                            preferred_element_type=jnp.float32)

    @pl.when(k == pl.num_programs(1) - 1)
    def _finalize():
        h = jnp.maximum(acc_ref[...] + b1_ref[...], 0.0)            # relu(fc1)
        z = jnp.dot(h.astype(w2_ref.dtype), w2_ref[...],            # fc2 (bf16 MXU)
                    preferred_element_type=jnp.float32) + b2_ref[...]
        # sigmoid(z) > 0.5  <=>  z > 0 : skip the EUP transcendental entirely.
        o_ref[...] = (z > 0.0).astype(o_ref.dtype)


def vq_encoder(x, w1, b1, w2, b2, *, tile_b=None, tile_k=None):
    """x: (B, V). w1: (V, H), b1: (H,), w2: (H, C), b2: (C,).

    Returns (B, C) float32 0/1 codes, matching the PyTorch module forward.
    """
    B, V = x.shape
    H = w1.shape[1]
    C = w2.shape[1]

    H_pad = _round_up(H, 128)          # lane-dense hidden
    C_pad = _round_up(C, 128)          # lane-dense output -> unmasked vst
    V_pad128 = _round_up(V, 128)

    # ---- per-generation VMEM budget ------------------------------------
    try:
        vmem_cap = int(pltpu.get_tpu_info().vmem_capacity_bytes)
    except Exception:
        vmem_cap = 64 << 20            # safe lower bound (v7x per-TC VMEM)
    usable = max(32 << 20, vmem_cap - (16 << 20))   # headroom for Mosaic scratch

    # ---- batch tile (matmul M dim): multiple of 8, ideally >= 128 -------
    if tile_b is None:
        tile_b = 256
    tile_b = min(tile_b, _round_up(B, 8))
    # Guarantee >= 2 batch tiles when possible so both v7x TensorCores get
    # work from the "parallel" batch axis; harmless on single-TC v5e/v6e.
    if B > 128 and _round_up(B, tile_b) // tile_b < 2:
        tile_b = 128
    B_pad = _round_up(B, tile_b)

    # ---- vocab (reduction) tile: make W1 resident when it fits ----------
    if tile_k is None:
        w1_resident_bytes = V_pad128 * H_pad * 2          # bf16 W1, 2 buffers
        if 2 * w1_resident_bytes <= usable // 2:
            tile_k = V_pad128                             # single K step
        else:
            tile_k = 2048 if usable >= (96 << 20) else 1024
    tile_k = min(tile_k, V_pad128)
    V_pad = _round_up(V, tile_k)

    bf16, f32 = jnp.bfloat16, jnp.float32
    x_p = _pad2(x.astype(bf16), B_pad, V_pad)
    w1_p = _pad2(w1.astype(bf16), V_pad, H_pad)
    w2_p = _pad2(w2.astype(bf16), H_pad, C_pad)
    b1_p = _pad1(b1.astype(f32), H_pad).reshape(1, H_pad)
    b2_p = _pad1(b2.astype(f32), C_pad).reshape(1, C_pad)

    # (batch tiles, K reduction tiles) — reduction axis last, by convention.
    grid = (B_pad // tile_b, V_pad // tile_k)

    # VMEM footprint: double-buffered pipeline blocks + f32 accumulator.
    need = (2 * tile_b * tile_k * 2          # x tile       (bf16)
            + 2 * tile_k * H_pad * 2         # W1 tile      (bf16)
            + 2 * 1 * H_pad * 4              # b1           (f32)
            + 2 * H_pad * C_pad * 2          # W2           (bf16)
            + 2 * 1 * C_pad * 4              # b2           (f32)
            + 2 * tile_b * C_pad * 4         # out tile     (f32)
            + tile_b * H_pad * 4)            # accumulator  (f32)
    vmem_limit = min(usable, max(32 << 20, need + (8 << 20)))

    out = pl.pallas_call(
        vq_encoder_kernel,
        out_shape=jax.ShapeDtypeStruct((B_pad, C_pad), jnp.float32),
        grid_spec=pltpu.PrefetchScalarGridSpec(
            num_scalar_prefetch=0,
            grid=grid,
            in_specs=[
                pl.BlockSpec((tile_b, tile_k), lambda i, k: (i, k)),  # x tile
                pl.BlockSpec((tile_k, H_pad), lambda i, k: (k, 0)),   # W1 K-tile
                pl.BlockSpec((1, H_pad), lambda i, k: (0, 0)),        # b1 (const)
                pl.BlockSpec((H_pad, C_pad), lambda i, k: (0, 0)),    # W2 (const)
                pl.BlockSpec((1, C_pad), lambda i, k: (0, 0)),        # b2 (const)
            ],
            out_specs=pl.BlockSpec((tile_b, C_pad), lambda i, k: (i, 0)),
            scratch_shapes=[pltpu.VMEM((tile_b, H_pad), jnp.float32)],
        ),
        compiler_params=pltpu.CompilerParams(
            dimension_semantics=("parallel", "arbitrary"),
            vmem_limit_bytes=vmem_limit),
    )(x_p, w1_p, b1_p, w2_p, b2_p)

    return out[:B, :C]


def vq_encoder_ref(x, w1, b1, w2, b2):
    h = jnp.maximum(x @ w1 + b1, 0.0)
    return (jax.nn.sigmoid(h @ w2 + b2) > 0.5).astype(jnp.float32)


if __name__ == "__main__":
    # Small shapes consistent with the module (vocab_size=512, hidden=128,
    # code_dim=128, batch=16).
    B, V, H, C = 16, 512, 128, 128
    key = jax.random.PRNGKey(0)
    kx, kw1, kb1, kw2, kb2 = jax.random.split(key, 5)

    x = jax.random.normal(kx, (B, V), dtype=jnp.float32)

    lim1 = 1.0 / V ** 0.5
    lim2 = 1.0 / H ** 0.5
    w1 = jax.random.uniform(kw1, (V, H), minval=-lim1, maxval=lim1, dtype=jnp.float32)
    b1 = jax.random.uniform(kb1, (H,), minval=-lim1, maxval=lim1, dtype=jnp.float32)
    w2 = jax.random.uniform(kw2, (H, C), minval=-lim2, maxval=lim2, dtype=jnp.float32)
    b2 = jax.random.uniform(kb2, (C,), minval=-lim2, maxval=lim2, dtype=jnp.float32)

    ref = vq_encoder_ref(x, w1, b1, w2, b2)
    # f32 pre-threshold logits for the boundary-tolerance check (bf16 streaming
    # may flip codes whose |z| is within bf16 rounding noise of 0).
    z_ref = jnp.maximum(x @ w1 + b1, 0.0) @ w2 + b2

    # Run both the auto path (W1 resident, single K step) and an explicitly
    # K-tiled path (tile_k=256 -> 2 reduction steps, accumulator init/finalize).
    for tk in (None, 256):
        out = vq_encoder(x, w1, b1, w2, b2, tile_k=tk)
        jax.block_until_ready(out)
        assert out.shape == (B, C) and out.dtype == jnp.float32
        mismatch = out != ref
        assert bool(jnp.all(~mismatch | (jnp.abs(z_ref) < 5e-2))), \
            f"Pallas kernel mismatch vs reference (tile_k={tk})"

    print("KERNEL_OK")
</pallas_src>

<mosaic_0001>
module attributes {stable_mosaic.version = 11 : i64} {
  func.func @vq_encoder_kernel(%arg0: i32, %arg1: i32, %arg2: memref<16x512xbf16, #tpu.memory_space<vmem>>, %arg3: memref<512x128xbf16, #tpu.memory_space<vmem>>, %arg4: memref<1x128xf32, #tpu.memory_space<vmem>>, %arg5: memref<128x128xbf16, #tpu.memory_space<vmem>>, %arg6: memref<1x128xf32, #tpu.memory_space<vmem>>, %arg7: memref<16x128xf32, #tpu.memory_space<vmem>>, %arg8: memref<16x128xf32, #tpu.memory_space<vmem>>) attributes {dimension_semantics = [#tpu.dimension_semantics<parallel>, #tpu.dimension_semantics<arbitrary>], iteration_bounds = array<i64: 1, 1>, scalar_prefetch = 0 : i64, scratch_operands = 1 : i64, tpu.core_type = #tpu.core_type<tc>, window_params = [{transform_indices = @transform_0, window_bounds = array<i64: 16, 512>}, {transform_indices = @transform_1, window_bounds = array<i64: 512, 128>}, {pipeline_mode = #tpu.pipeline_mode<synchronous>, transform_indices = @transform_2, window_bounds = array<i64: 1, 128>}, {pipeline_mode = #tpu.pipeline_mode<synchronous>, transform_indices = @transform_3, window_bounds = array<i64: 128, 128>}, {pipeline_mode = #tpu.pipeline_mode<synchronous>, transform_indices = @transform_4, window_bounds = array<i64: 1, 128>}, {transform_indices = @transform_5, window_bounds = array<i64: 16, 128>}]} {
    %c0_i32 = arith.constant 0 : i32
    %0 = arith.cmpi eq, %arg1, %c0_i32 : i32
    %1 = arith.extui %0 : i1 to i32
    %c0_i32_0 = arith.constant 0 : i32
    %2 = arith.cmpi ne, %1, %c0_i32_0 : i32
    scf.if %2 {
      %cst_10 = arith.constant 0.000000e+00 : f32
      %12 = vector.broadcast %cst_10 : f32 to vector<16x128xf32>
      %c0_11 = arith.constant 0 : index
      %c0_12 = arith.constant 0 : index
      %13 = vector.load %arg8[%c0_11, %c0_12] : memref<16x128xf32, #tpu.memory_space<vmem>>, vector<16x128xf32>
      tpu.vector_store %arg8[%c0_11, %c0_12], %12 {strides = array<i32>} : memref<16x128xf32, #tpu.memory_space<vmem>>, vector<16x128xf32>,
    } else {
    }
    %c0 = arith.constant 0 : index
    %c0_1 = arith.constant 0 : index
    %3 = vector.load %arg8[%c0, %c0_1] : memref<16x128xf32, #tpu.memory_space<vmem>>, vector<16x128xf32>
    %c0_2 = arith.constant 0 : index
    %c0_3 = arith.constant 0 : index
    %4 = vector.load %arg2[%c0_2, %c0_3] : memref<16x512xbf16, #tpu.memory_space<vmem>>, vector<16x512xbf16>
    %c0_4 = arith.constant 0 : index
    %c0_5 = arith.constant 0 : index
    %5 = vector.load %arg3[%c0_4, %c0_5] : memref<512x128xbf16, #tpu.memory_space<vmem>>, vector<512x128xbf16>
    %cst = arith.constant dense<0.000000e+00> : vector<16x128xf32>
    %6 = tpu.matmul %4, %5, %cst {dimension_numbers = #tpu.dot_dimension_numbers<[1], [0], [0], [1], [0, 0, 1, 1], [], []>} : vector<16x512xbf16>, vector<512x128xbf16>, vector<16x128xf32> -> vector<16x128xf32>
    %7 = arith.addf %3, %6 : vector<16x128xf32>
    %c0_6 = arith.constant 0 : index
    %c0_7 = arith.constant 0 : index
    %8 = vector.load %arg8[%c0_6, %c0_7] : memref<16x128xf32, #tpu.memory_space<vmem>>, vector<16x128xf32>
    tpu.vector_store %arg8[%c0_6, %c0_7], %7 {strides = array<i32>} : memref<16x128xf32, #tpu.memory_space<vmem>>, vector<16x128xf32>,
    %c0_i32_8 = arith.constant 0 : i32
    %9 = arith.cmpi eq, %arg1, %c0_i32_8 : i32
    %10 = arith.extui %9 : i1 to i32
    %c0_i32_9 = arith.constant 0 : i32
    %11 = arith.cmpi ne, %10, %c0_i32_9 : i32
    scf.if %11 {
      %c0_10 = arith.constant 0 : index
      %c0_11 = arith.constant 0 : index
      %12 = vector.load %arg8[%c0_10, %c0_11] : memref<16x128xf32, #tpu.memory_space<vmem>>, vector<16x128xf32>
      %c0_12 = arith.constant 0 : index
      %c0_13 = arith.constant 0 : index
      %13 = vector.load %arg4[%c0_12, %c0_13] : memref<1x128xf32, #tpu.memory_space<vmem>>, vector<1x128xf32>
      %14 = vector.broadcast %13 : vector<1x128xf32> to vector<16x128xf32>
      %15 = arith.addf %12, %14 : vector<16x128xf32>
      %cst_14 = arith.constant 0.000000e+00 : f32
      %16 = vector.broadcast %cst_14 : f32 to vector<16x128xf32>
      %17 = arith.maximumf %15, %16 : vector<16x128xf32>
      %18 = arith.truncf %17 : vector<16x128xf32> to vector<16x128xbf16>
      %c0_15 = arith.constant 0 : index
      %c0_16 = arith.constant 0 : index
      %19 = vector.load %arg5[%c0_15, %c0_16] : memref<128x128xbf16, #tpu.memory_space<vmem>>, vector<128x128xbf16>
      %cst_17 = arith.constant dense<0.000000e+00> : vector<16x128xf32>
      %20 = tpu.matmul %18, %19, %cst_17 {dimension_numbers = #tpu.dot_dimension_numbers<[1], [0], [0], [1], [0, 0, 1, 1], [], []>} : vector<16x128xbf16>, vector<128x128xbf16>, vector<16x128xf32> -> vector<16x128xf32>
      %c0_18 = arith.constant 0 : index
      %c0_19 = arith.constant 0 : index
      %21 = vector.load %arg6[%c0_18, %c0_19] : memref<1x128xf32, #tpu.memory_space<vmem>>, vector<1x128xf32>
      %22 = vector.broadcast %21 : vector<1x128xf32> to vector<16x128xf32>
      %23 = arith.addf %20, %22 : vector<16x128xf32>
      %cst_20 = arith.constant 0.000000e+00 : f32
      %24 = vector.broadcast %cst_20 : f32 to vector<16x128xf32>
      %25 = arith.cmpf ogt, %23, %24 : vector<16x128xf32>
      %26 = arith.extui %25 : vector<16x128xi1> to vector<16x128xi32>
      %27 = arith.sitofp %26 : vector<16x128xi32> to vector<16x128xf32>
      %c0_21 = arith.constant 0 : index
      %c0_22 = arith.constant 0 : index
      %28 = vector.load %arg7[%c0_21, %c0_22] : memref<16x128xf32, #tpu.memory_space<vmem>>, vector<16x128xf32>
      tpu.vector_store %arg7[%c0_21, %c0_22], %27 {strides = array<i32>} : memref<16x128xf32, #tpu.memory_space<vmem>>, vector<16x128xf32>,
    } else {
    }
    return
  }
  func.func @transform_0(%arg0: i32, %arg1: i32) -> (i32, i32) {
    %c0_i32 = arith.constant 0 : i32
    return %arg0, %arg1 : i32, i32
  }
  func.func @transform_1(%arg0: i32, %arg1: i32) -> (i32, i32) {
    %c0_i32 = arith.constant 0 : i32
    %c0_i32_0 = arith.constant 0 : i32
    return %arg1, %c0_i32 : i32, i32
  }
  func.func @transform_2(%arg0: i32, %arg1: i32) -> (i32, i32) {
    %c0_i32 = arith.constant 0 : i32
    %c0_i32_0 = arith.constant 0 : i32
    %c0_i32_1 = arith.constant 0 : i32
    return %c0_i32, %c0_i32_0 : i32, i32
  }
  func.func @transform_3(%arg0: i32, %arg1: i32) -> (i32, i32) {
    %c0_i32 = arith.constant 0 : i32
    %c0_i32_0 = arith.constant 0 : i32
    %c0_i32_1 = arith.constant 0 : i32
    return %c0_i32, %c0_i32_0 : i32, i32
  }
  func.func @transform_4(%arg0: i32, %arg1: i32) -> (i32, i32) {
    %c0_i32 = arith.constant 0 : i32
    %c0_i32_0 = arith.constant 0 : i32
    %c0_i32_1 = arith.constant 0 : i32
    return %c0_i32, %c0_i32_0 : i32, i32
  }
  func.func @transform_5(%arg0: i32, %arg1: i32) -> (i32, i32) {
    %c0_i32 = arith.constant 0 : i32
    %c0_i32_0 = arith.constant 0 : i32
    return %arg0, %c0_i32 : i32, i32
  }
}

</mosaic_0001>

<llo_original>
// kernel: tpu_custom_call.1
$region0: #{tpu_custom_call.1}
  #allocation0 [shape = 'u32[]', space=smem, size = 0x4, offset = 0x4, fixed_abs, tag = 'smem constant byte address 0x4 - core index']
  #allocation1 [shape = 'u32[144,128]{1,0:T(1,128)}', space=vmem, size = 0x12000, scoped, tag = 'internal scratch']
  #allocation2 [shape = 'f32[16,128]{1,0:T(8,128)}', space=vmem, size = 0x2000, scoped, tag = 'scratch operand']
  %s0 = inlined_call_operand.hbm [shape: bf16[16,512], index: 0, kind: input, shape index: {}]
  %s1 = inlined_call_operand.hbm [shape: bf16[512,128], index: 1, kind: input, shape index: {}]
  %s2 = inlined_call_operand.vmem [shape: f32[1,128], index: 2, kind: input, shape index: {}]
  %s3 = inlined_call_operand.hbm [shape: bf16[128,128], index: 3, kind: input, shape index: {}]
  %s4 = inlined_call_operand.vmem [shape: f32[1,128], index: 4, kind: input, shape index: {}]
  %s5 = inlined_call_operand.hbm [shape: f32[16,128], index: 5, kind: output, shape index: {}]
  %s6 = sld [smem:[#allocation0]]
  $region50: #{tpu_custom_call.1} parent=0
    _
  %s8 = ssub.s32 1, %s6
  %s9 = scalar_select 0, %s8, %s6
  $region1: #{tpu_custom_call.1} parent=0
    #allocation3 [shape = 'u8[16384]{0}', space=vmem, size = 0x4000, scoped, tag = 'input window, operand 0, single buffered']
    #allocation4 [shape = 's32[1]{0}', space=sflag, size = 0x4, scoped, tag = 'scoped memory for tpu_custom_call.1']
    #allocation5 [shape = 's32[1]{0}', space=sflag, size = 0x4, scoped, tag = 'scoped memory for tpu_custom_call.1']
    #allocation6 [shape = 'u8[131072]{0}', space=vmem, size = 0x20000, scoped, tag = 'input window, operand 1, single buffered']
    #allocation7 [shape = 's32[1]{0}', space=sflag, size = 0x4, scoped, tag = 'scoped memory for tpu_custom_call.1']
    #allocation8 [shape = 'u8[32768]{0}', space=vmem, size = 0x8000, scoped, tag = 'input window, operand 3, single buffered']
    #allocation9 [shape = 'u8[8192]{0}', space=vmem, size = 0x2000, scoped, tag = 'output window, operand 0, single buffered']
    %10 = vsyncpa [#allocation4], 0
    %11 = vsyncpa [#allocation7], 0
    %12 = vsyncpa [#allocation5], 0
    // Predicated region
    $region2: #{tpu_custom_call.1} parent=1 // pred_check
      _
    $region3: #{tpu_custom_call.1} parent=1 // pred_check_branch
      %14 = sbr.rel (0) target = $region5
    $region4: #{tpu_custom_call.1} parent=1 // pred_region
      %s16 = ssub.s32 512, 512
      %17 = vsyncadd [#allocation4], %s16
      %s18 = sshll.u32 [#allocation3], 4
      %s19 = int_to_ptr.vmem [resolvable:$true] %s18
      %24 = dma.hbm_to_vmem [thread:$0]  %s0, 512, %s19, [#allocation4], 256, 256, 16
    $region5: #{tpu_custom_call.1} parent=1 // pred_fallthru
      _
    // Predicated region
    $region6: #{tpu_custom_call.1} parent=1 // pred_check
      _
    $region7: #{tpu_custom_call.1} parent=1 // pred_check_branch
      %26 = sbr.rel (0) target = $region9
    $region8: #{tpu_custom_call.1} parent=1 // pred_region
      %s28 = ssub.s32 4096, 4096
      %29 = vsyncadd [#allocation7], %s28
      %s30 = sshll.u32 [#allocation6], 4
      %s31 = int_to_ptr.vmem [resolvable:$true] %s30
      %36 = dma.hbm_to_vmem [thread:$0]  %s1, 4096, %s31, [#allocation7], 64, 64, 4
    $region9: #{tpu_custom_call.1} parent=1 // pred_fallthru
      _
    // Predicated region
    $region10: #{tpu_custom_call.1} parent=1 // pred_check
      _
    $region11: #{tpu_custom_call.1} parent=1 // pred_check_branch
      %38 = sbr.rel (0) target = $region13
    $region12: #{tpu_custom_call.1} parent=1 // pred_region
      _
    $region13: #{tpu_custom_call.1} parent=1 // pred_fallthru
      _
    // Predicated region
    $region14: #{tpu_custom_call.1} parent=1 // pred_check
      _
    $region15: #{tpu_custom_call.1} parent=1 // pred_check_branch
      %40 = sbr.rel (0) target = $region17
    $region16: #{tpu_custom_call.1} parent=1 // pred_region
      %s42 = ssub.s32 1024, 1024
      %43 = vsyncadd [#allocation7], %s42
      %s44 = sshll.u32 [#allocation8], 4
      %s45 = int_to_ptr.vmem [resolvable:$true] %s44
      %50 = dma.hbm_to_vmem [thread:$0]  %s3, 1024, %s45, [#allocation7], 64, 64, 4
    $region17: #{tpu_custom_call.1} parent=1 // pred_fallthru
      _
    // Predicated region
    $region18: #{tpu_custom_call.1} parent=1 // pred_check
      _
    $region19: #{tpu_custom_call.1} parent=1 // pred_check_branch
      %52 = sbr.rel (0) target = $region21
    $region20: #{tpu_custom_call.1} parent=1 // pred_region
      _
    $region21: #{tpu_custom_call.1} parent=1 // pred_fallthru
      _
    // Predicated region
    $region22: #{tpu_custom_call.1} parent=1 // pred_check
      _
    $region23: #{tpu_custom_call.1} parent=1 // pred_check_branch
      %54 = sbr.rel (0) target = $region25
    $region24: #{tpu_custom_call.1} parent=1 // pred_region
      %55 = dma.done [#allocation4], 512
    $region25: #{tpu_custom_call.1} parent=1 // pred_fallthru
      _
    // Predicated region
    $region26: #{tpu_custom_call.1} parent=1 // pred_check
      _
    $region27: #{tpu_custom_call.1} parent=1 // pred_check_branch
      %57 = sbr.rel (0) target = $region29
    $region28: #{tpu_custom_call.1} parent=1 // pred_region
      %58 = dma.done [#allocation7], 4096
    $region29: #{tpu_custom_call.1} parent=1 // pred_fallthru
      _
    // Predicated region
    $region30: #{tpu_custom_call.1} parent=1 // pred_check
      _
    $region31: #{tpu_custom_call.1} parent=1 // pred_check_branch
      %60 = sbr.rel (0) target = $region33
    $region32: #{tpu_custom_call.1} parent=1 // pred_region
      %61 = dma.done [#allocation7], 1024
    $region33: #{tpu_custom_call.1} parent=1 // pred_fallthru
      _
    %p63 = scmp.eq.s32.totalorder 0, 0
    // Predicated region
    $region34: #{tpu_custom_call.1} parent=1 // pred_check
      %p64 = pneg %p63
    $region35: #{tpu_custom_call.1} parent=1 // pred_check_branch
      %66 = sbr.rel (%p64) target = $region37
    $region36: #{tpu_custom_call.1} parent=1 // pred_region
      %67 = vst [vmem:[#allocation2] sm:$0xff] 0.0
      %68 = vst [vmem:[#allocation2 + $0x8] sm:$0xff] 0.0
    $region37: #{tpu_custom_call.1} parent=1 // pred_fallthru
      _
    %v69 = vld [vmem:[#allocation2] sm:$0xff]
    %v70 = vld [vmem:[#allocation2 + $0x8] sm:$0xff]
    %v71 = vld [vmem:[#allocation3] sm:$0xff]
    %v72 = vld [vmem:[#allocation3 + $0x8] sm:$0xff]
    %v73 = vld [vmem:[#allocation3 + $0x10] sm:$0xff]
    %v74 = vld [vmem:[#allocation3 + $0x18] sm:$0xff]
    %v75 = vld [vmem:[#allocation6] sm:$0xf]
    %v76 = vld [vmem:[#allocation6 + $0x4] sm:$0xf]
    %v77 = vld [vmem:[#allocation6 + $0x8] sm:$0xf]
    %v78 = vld [vmem:[#allocation6 + $0xc] sm:$0xf]
    %v79 = vld [vmem:[#allocation6 + $0x10] sm:$0xf]
    %v80 = vld [vmem:[#allocation6 + $0x14] sm:$0xf]
    %v81 = vld [vmem:[#allocation6 + $0x18] sm:$0xf]
    %v82 = vld [vmem:[#allocation6 + $0x1c] sm:$0xf]
    %v83 = vld [vmem:[#allocation6 + $0x20] sm:$0xf]
    %v84 = vld [vmem:[#allocation6 + $0x24] sm:$0xf]
    %v85 = vld [vmem:[#allocation6 + $0x28] sm:$0xf]
    %v86 = vld [vmem:[#allocation6 + $0x2c] sm:$0xf]
    %v87 = vld [vmem:[#allocation6 + $0x30] sm:$0xf]
    %v88 = vld [vmem:[#allocation6 + $0x34] sm:$0xf]
    %v89 = vld [vmem:[#allocation6 + $0x38] sm:$0xf]
    %v90 = vld [vmem:[#allocation6 + $0x3c] sm:$0xf]
    %v91 = vld [vmem:[#allocation6 + $0x40] sm:$0xf]
    %v92 = vld [vmem:[#allocation6 + $0x44] sm:$0xf]
    %v93 = vld [vmem:[#allocation6 + $0x48] sm:$0xf]
    %v94 = vld [vmem:[#allocation6 + $0x4c] sm:$0xf]
    %v95 = vld [vmem:[#allocation6 + $0x50] sm:$0xf]
    %v96 = vld [vmem:[#allocation6 + $0x54] sm:$0xf]
    %v97 = vld [vmem:[#allocation6 + $0x58] sm:$0xf]
    %v98 = vld [vmem:[#allocation6 + $0x5c] sm:$0xf]
    %v99 = vld [vmem:[#allocation6 + $0x60] sm:$0xf]
    %v100 = vld [vmem:[#allocation6 + $0x64] sm:$0xf]
    %v101 = vld [vmem:[#allocation6 + $0x68] sm:$0xf]
    %v102 = vld [vmem:[#allocation6 + $0x6c] sm:$0xf]
    %v103 = vld [vmem:[#allocation6 + $0x70] sm:$0xf]
    %v104 = vld [vmem:[#allocation6 + $0x74] sm:$0xf]
    %v105 = vld [vmem:[#allocation6 + $0x78] sm:$0xf]
    %v106 = vld [vmem:[#allocation6 + $0x7c] sm:$0xf]
    %v107 = vld [vmem:[#allocation6 + $0x80] sm:$0xf]
    %v108 = vld [vmem:[#allocation6 + $0x84] sm:$0xf]
    %v109 = vld [vmem:[#allocation6 + $0x88] sm:$0xf]
    %v110 = vld [vmem:[#allocation6 + $0x8c] sm:$0xf]
    %v111 = vld [vmem:[#allocation6 + $0x90] sm:$0xf]
    %v112 = vld [vmem:[#allocation6 + $0x94] sm:$0xf]
    %v113 = vld [vmem:[#allocation6 + $0x98] sm:$0xf]
    %v114 = vld [vmem:[#allocation6 + $0x9c] sm:$0xf]
    %v115 = vld [vmem:[#allocation6 + $0xa0] sm:$0xf]
    %v116 = vld [vmem:[#allocation6 + $0xa4] sm:$0xf]
    %v117 = vld [vmem:[#allocation6 + $0xa8] sm:$0xf]
    %v118 = vld [vmem:[#allocation6 + $0xac] sm:$0xf]
    %v119 = vld [vmem:[#allocation6 + $0xb0] sm:$0xf]
    %v120 = vld [vmem:[#allocation6 + $0xb4] sm:$0xf]
    %v121 = vld [vmem:[#allocation6 + $0xb8] sm:$0xf]
    %v122 = vld [vmem:[#allocation6 + $0xbc] sm:$0xf]
    %v123 = vld [vmem:[#allocation6 + $0xc0] sm:$0xf]
    %v124 = vld [vmem:[#allocation6 + $0xc4] sm:$0xf]
    %v125 = vld [vmem:[#allocation6 + $0xc8] sm:$0xf]
    %v126 = vld [vmem:[#allocation6 + $0xcc] sm:$0xf]
    %v127 = vld [vmem:[#allocation6 + $0xd0] sm:$0xf]
    %v128 = vld [vmem:[#allocation6 + $0xd4] sm:$0xf]
    %v129 = vld [vmem:[#allocation6 + $0xd8] sm:$0xf]
    %v130 = vld [vmem:[#allocation6 + $0xdc] sm:$0xf]
    %v131 = vld [vmem:[#allocation6 + $0xe0] sm:$0xf]
    %v132 = vld [vmem:[#allocation6 + $0xe4] sm:$0xf]
    %v133 = vld [vmem:[#allocation6 + $0xe8] sm:$0xf]
    %v134 = vld [vmem:[#allocation6 + $0xec] sm:$0xf]
    %v135 = vld [vmem:[#allocation6 + $0xf0] sm:$0xf]
    %v136 = vld [vmem:[#allocation6 + $0xf4] sm:$0xf]
    %v137 = vld [vmem:[#allocation6 + $0xf8] sm:$0xf]
    %v138 = vld [vmem:[#allocation6 + $0xfc] sm:$0xf]
    %v143 = vunpack.c.l.b16 %v71
    %v144 = vunpack.c.h.b16 %v71
    %v145 = vunpack.c.l.b16 %v72
    %v146 = vunpack.c.h.b16 %v72
    %v147 = vunpack.c.l.b16 %v73
    %v148 = vunpack.c.h.b16 %v73
    %v149 = vunpack.c.l.b16 %v74
    %v150 = vunpack.c.h.b16 %v74
    %v151 = vpack.c.b16 %v147, %v143
    %v152 = vpack.c.b16 %v148, %v144
    %v153 = vpack.c.b16 %v149, %v145
    %v154 = vpack.c.b16 %v150, %v146
    %v223 = vunpack.c.l.b16 %v75
    %v224 = vunpack.c.l.b16 %v76
    %v225 = vunpack.c.l.b16 %v77
    %v226 = vunpack.c.l.b16 %v78
    %v227 = vunpack.c.l.b16 %v79
    %v228 = vunpack.c.l.b16 %v80
    %v229 = vunpack.c.l.b16 %v81
    %v230 = vunpack.c.l.b16 %v82
    %v231 = vunpack.c.l.b16 %v83
    %v232 = vunpack.c.l.b16 %v84
    %v233 = vunpack.c.l.b16 %v85
    %v234 = vunpack.c.l.b16 %v86
    %v235 = vunpack.c.l.b16 %v87
    %v236 = vunpack.c.l.b16 %v88
    %v237 = vunpack.c.l.b16 %v89
    %v238 = vunpack.c.l.b16 %v90
    %v239 = vunpack.c.l.b16 %v91
    %v240 = vunpack.c.l.b16 %v92
    %v241 = vunpack.c.l.b16 %v93
    %v242 = vunpack.c.l.b16 %v94
    %v243 = vunpack.c.l.b16 %v95
    %v244 = vunpack.c.l.b16 %v96
    %v245 = vunpack.c.l.b16 %v97
    %v246 = vunpack.c.l.b16 %v98
    %v247 = vunpack.c.l.b16 %v99
    %v248 = vunpack.c.l.b16 %v100
    %v249 = vunpack.c.l.b16 %v101
    %v250 = vunpack.c.l.b16 %v102
    %v251 = vunpack.c.l.b16 %v103
    %v252 = vunpack.c.l.b16 %v104
    %v253 = vunpack.c.l.b16 %v105
    %v254 = vunpack.c.l.b16 %v106
    %v255 = vunpack.c.l.b16 %v107
    %v256 = vunpack.c.l.b16 %v108
    %v257 = vunpack.c.l.b16 %v109
    %v258 = vunpack.c.l.b16 %v110
    %v259 = vunpack.c.l.b16 %v111
    %v260 = vunpack.c.l.b16 %v112
    %v261 = vunpack.c.l.b16 %v113
    %v262 = vunpack.c.l.b16 %v114
    %v263 = vunpack.c.l.b16 %v115
    %v264 = vunpack.c.l.b16 %v116
    %v265 = vunpack.c.l.b16 %v117
    %v266 = vunpack.c.l.b16 %v118
    %v267 = vunpack.c.l.b16 %v119
    %v268 = vunpack.c.l.b16 %v120
    %v269 = vunpack.c.l.b16 %v121
    %v270 = vunpack.c.l.b16 %v122
    %v271 = vunpack.c.l.b16 %v123
    %v272 = vunpack.c.l.b16 %v124
    %v273 = vunpack.c.l.b16 %v125
    %v274 = vunpack.c.l.b16 %v126
    %v275 = vunpack.c.l.b16 %v127
    %v276 = vunpack.c.l.b16 %v128
    %v277 = vunpack.c.l.b16 %v129
    %v278 = vunpack.c.l.b16 %v130
    %v279 = vunpack.c.l.b16 %v131
    %v280 = vunpack.c.l.b16 %v132
    %v281 = vunpack.c.l.b16 %v133
    %v282 = vunpack.c.l.b16 %v134
    %v283 = vunpack.c.l.b16 %v135
    %v284 = vunpack.c.l.b16 %v136
    %v285 = vunpack.c.l.b16 %v137
    %v286 = vunpack.c.l.b16 %v138
    %v287 = vpack.c.b16 %v224, %v223
    %v288 = vpack.c.b16 %v226, %v225
    %v289 = vpack.c.b16 %v228, %v227
    %v290 = vpack.c.b16 %v230, %v229
    %v291 = vpack.c.b16 %v232, %v231
    %v292 = vpack.c.b16 %v234, %v233
    %v293 = vpack.c.b16 %v236, %v235
    %v294 = vpack.c.b16 %v238, %v237
    %v295 = vpack.c.b16 %v240, %v239
    %v296 = vpack.c.b16 %v242, %v241
    %v297 = vpack.c.b16 %v244, %v243
    %v298 = vpack.c.b16 %v246, %v245
    %v299 = vpack.c.b16 %v248, %v247
    %v300 = vpack.c.b16 %v250, %v249
    %v301 = vpack.c.b16 %v252, %v251
    %v302 = vpack.c.b16 %v254, %v253
    %v303 = vpack.c.b16 %v256, %v255
    %v304 = vpack.c.b16 %v258, %v257
    %v305 = vpack.c.b16 %v260, %v259
    %v306 = vpack.c.b16 %v262, %v261
    %v307 = vpack.c.b16 %v264, %v263
    %v308 = vpack.c.b16 %v266, %v265
    %v309 = vpack.c.b16 %v268, %v267
    %v310 = vpack.c.b16 %v270, %v269
    %v311 = vpack.c.b16 %v272, %v271
    %v312 = vpack.c.b16 %v274, %v273
    %v313 = vpack.c.b16 %v276, %v275
    %v314 = vpack.c.b16 %v278, %v277
    %v315 = vpack.c.b16 %v280, %v279
    %v316 = vpack.c.b16 %v282, %v281
    %v317 = vpack.c.b16 %v284, %v283
    %v318 = vpack.c.b16 %v286, %v285
    %351 = vmatprep.subr.bf16.mxu0 0
    %352 = vmatpush1.bf16.msra.mxu0 %v287
    %353 = vmatprep.subr.bf16.mxu0 0
    %354 = vmatpush1.bf16.msra.mxu0 %v288
    %355 = vmatprep.subr.bf16.mxu0 0
    %356 = vmatpush1.bf16.msra.mxu0 %v289
    %357 = vmatprep.subr.bf16.mxu0 0
    %358 = vmatpush1.bf16.msra.mxu0 %v290
    %359 = vmatprep.subr.bf16.mxu0 0
    %360 = vmatpush1.bf16.msra.mxu0 %v291
    %361 = vmatprep.subr.bf16.mxu0 0
    %362 = vmatpush1.bf16.msra.mxu0 %v292
    %363 = vmatprep.subr.bf16.mxu0 0
    %364 = vmatpush1.bf16.msra.mxu0 %v293
    %365 = vmatprep.subr.bf16.mxu0 0
    %366 = vmatpush1.bf16.msra.mxu0 %v294
    %367 = vmatprep.subr.bf16.mxu0 0
    %368 = vmatpush1.bf16.msra.mxu0 %v295
    %369 = vmatprep.subr.bf16.mxu0 0
    %370 = vmatpush1.bf16.msra.mxu0 %v296
    %371 = vmatprep.subr.bf16.mxu0 0
    %372 = vmatpush1.bf16.msra.mxu0 %v297
    %373 = vmatprep.subr.bf16.mxu0 0
    %374 = vmatpush1.bf16.msra.mxu0 %v298
    %375 = vmatprep.subr.bf16.mxu0 0
    %376 = vmatpush1.bf16.msra.mxu0 %v299
    %377 = vmatprep.subr.bf16.mxu0 0
    %378 = vmatpush1.bf16.msra.mxu0 %v300
    %379 = vmatprep.subr.bf16.mxu0 0
    %380 = vmatpush1.bf16.msra.mxu0 %v301
    %381 = vmatprep.subr.bf16.mxu0 0
    %382 = vmatpush1.bf16.msra.mxu0 %v302
    %383 = vmatprep.mubr.bf16.mxu0 %v152
    %384 = vmatmul.mubr.bf16.gmra.mrb[0].mxu0 %v151
    %v385 = vpop.f32.mrb[0].mxu0
    %v386 = vadd.f32 0.0, %v385
    %v387 = vpop.f32.mrb[0].mxu0
    %v388 = vpop.f32.mrb[0].mxu0
    %v389 = vadd.f32 0.0, %v388
    %v390 = vpop.f32.mrb[0].mxu0
    %391 = vdwg.mxu0
    %392 = vmatprep.subr.bf16.mxu0 0
    %393 = vmatpush1.bf16.msra.mxu0 %v303
    %394 = vmatprep.subr.bf16.mxu0 0
    %395 = vmatpush1.bf16.msra.mxu0 %v304
    %396 = vmatprep.subr.bf16.mxu0 0
    %397 = vmatpush1.bf16.msra.mxu0 %v305
    %398 = vmatprep.subr.bf16.mxu0 0
    %399 = vmatpush1.bf16.msra.mxu0 %v306
    %400 = vmatprep.subr.bf16.mxu0 0
    %401 = vmatpush1.bf16.msra.mxu0 %v307
    %402 = vmatprep.subr.bf16.mxu0 0
    %403 = vmatpush1.bf16.msra.mxu0 %v308
    %404 = vmatprep.subr.bf16.mxu0 0
    %405 = vmatpush1.bf16.msra.mxu0 %v309
    %406 = vmatprep.subr.bf16.mxu0 0
    %407 = vmatpush1.bf16.msra.mxu0 %v310
    %408 = vmatprep.subr.bf16.mxu0 0
    %409 = vmatpush1.bf16.msra.mxu0 %v311
    %410 = vmatprep.subr.bf16.mxu0 0
    %411 = vmatpush1.bf16.msra.mxu0 %v312
    %412 = vmatprep.subr.bf16.mxu0 0
    %413 = vmatpush1.bf16.msra.mxu0 %v313
    %414 = vmatprep.subr.bf16.mxu0 0
    %415 = vmatpush1.bf16.msra.mxu0 %v314
    %416 = vmatprep.subr.bf16.mxu0 0
    %417 = vmatpush1.bf16.msra.mxu0 %v315
    %418 = vmatprep.subr.bf16.mxu0 0
    %419 = vmatpush1.bf16.msra.mxu0 %v316
    %420 = vmatprep.subr.bf16.mxu0 0
    %421 = vmatpush1.bf16.msra.mxu0 %v317
    %422 = vmatprep.subr.bf16.mxu0 0
    %423 = vmatpush1.bf16.msra.mxu0 %v318
    %424 = vmatprep.mubr.bf16.mxu0 %v154
    %425 = vmatmul.mubr.bf16.gmra.mrb[0].mxu0 %v153
    %v426 = vpop.f32.mrb[0].mxu0
    %v427 = vadd.f32 %v386, %v426
    %v428 = vpop.f32.mrb[0].mxu0
    %v429 = vpop.f32.mrb[0].mxu0
    %v430 = vadd.f32 %v389, %v429
    %v431 = vpop.f32.mrb[0].mxu0
    %432 = vdwg.mxu0
    %v433 = vadd.f32 %v69, %v427
    %v434 = vadd.f32 %v70, %v430
    %435 = vst [vmem:[#allocation2] sm:$0xff] %v433
    %436 = vst [vmem:[#allocation2 + $0x8] sm:$0xff] %v434
    // Predicated region
    $region38: #{tpu_custom_call.1} parent=1 // pred_check
      %p437 = pneg %p63
    $region39: #{tpu_custom_call.1} parent=1 // pred_check_branch
      %439 = sbr.rel (%p437) target = $region41
    $region40: #{tpu_custom_call.1} parent=1 // pred_region
      %v440 = vld [vmem:[#allocation2] sm:$0xff]
      %v441 = vld [vmem:[#allocation2 + $0x8] sm:$0xff]
      %v442 = vld [vmem:[%s2] sm:$0x1]
      %v444 = vlaneseq
      %v445 = vshrl.u32 %v444, 7
      %v446 = vsub.s32 0, %v445
      %v447 = vrot.slane %v442, %v446
      %v449 = vadd.f32 %v440, %v447
      %v450 = vadd.f32 %v441, %v447
      %v451 = vmax.f32 %v449, 0.0
      %v452 = vmax.f32 %v450, 0.0
      %v453 = vpack.c.bf16 %v452, %v451
      %v454 = vld [vmem:[#allocation8] sm:$0xf]
      %v455 = vld [vmem:[#allocation8 + $0x4] sm:$0xf]
      %v456 = vld [vmem:[#allocation8 + $0x8] sm:$0xf]
      %v457 = vld [vmem:[#allocation8 + $0xc] sm:$0xf]
      %v458 = vld [vmem:[#allocation8 + $0x10] sm:$0xf]
      %v459 = vld [vmem:[#allocation8 + $0x14] sm:$0xf]
      %v460 = vld [vmem:[#allocation8 + $0x18] sm:$0xf]
      %v461 = vld [vmem:[#allocation8 + $0x1c] sm:$0xf]
      %v462 = vld [vmem:[#allocation8 + $0x20] sm:$0xf]
      %v463 = vld [vmem:[#allocation8 + $0x24] sm:$0xf]
      %v464 = vld [vmem:[#allocation8 + $0x28] sm:$0xf]
      %v465 = vld [vmem:[#allocation8 + $0x2c] sm:$0xf]
      %v466 = vld [vmem:[#allocation8 + $0x30] sm:$0xf]
      %v467 = vld [vmem:[#allocation8 + $0x34] sm:$0xf]
      %v468 = vld [vmem:[#allocation8 + $0x38] sm:$0xf]
      %v469 = vld [vmem:[#allocation8 + $0x3c] sm:$0xf]
      %v470 = vld [vmem:[%s4] sm:$0x1]
      %v472 = vlaneseq
      %v473 = vshrl.u32 %v472, 7
      %v474 = vsub.s32 0, %v473
      %v475 = vrot.slane %v470, %v474
      %v493 = vunpack.c.l.b16 %v454
      %v494 = vunpack.c.l.b16 %v455
      %v495 = vunpack.c.l.b16 %v456
      %v496 = vunpack.c.l.b16 %v457
      %v497 = vunpack.c.l.b16 %v458
      %v498 = vunpack.c.l.b16 %v459
      %v499 = vunpack.c.l.b16 %v460
      %v500 = vunpack.c.l.b16 %v461
      %v501 = vunpack.c.l.b16 %v462
      %v502 = vunpack.c.l.b16 %v463
      %v503 = vunpack.c.l.b16 %v464
      %v504 = vunpack.c.l.b16 %v465
      %v505 = vunpack.c.l.b16 %v466
      %v506 = vunpack.c.l.b16 %v467
      %v507 = vunpack.c.l.b16 %v468
      %v508 = vunpack.c.l.b16 %v469
      %v509 = vpack.c.b16 %v494, %v493
      %v510 = vpack.c.b16 %v496, %v495
      %v511 = vpack.c.b16 %v498, %v497
      %v512 = vpack.c.b16 %v500, %v499
      %v513 = vpack.c.b16 %v502, %v501
      %v514 = vpack.c.b16 %v504, %v503
      %v515 = vpack.c.b16 %v506, %v505
      %v516 = vpack.c.b16 %v508, %v507
      %525 = vmatprep.subr.bf16.mxu0 0
      %526 = vmatpush1.bf16.msra.mxu0 %v509
      %527 = vmatprep.subr.bf16.mxu0 0
      %528 = vmatpush1.bf16.msra.mxu0 %v510
      %529 = vmatprep.subr.bf16.mxu0 0
      %530 = vmatpush1.bf16.msra.mxu0 %v511
      %531 = vmatprep.subr.bf16.mxu0 0
      %532 = vmatpush1.bf16.msra.mxu0 %v512
      %533 = vmatprep.subr.bf16.mxu0 0
      %534 = vmatpush1.bf16.msra.mxu0 %v513
      %535 = vmatprep.subr.bf16.mxu0 0
      %536 = vmatpush1.bf16.msra.mxu0 %v514
      %537 = vmatprep.subr.bf16.mxu0 0
      %538 = vmatpush1.bf16.msra.mxu0 %v515
      %539 = vmatprep.subr.bf16.mxu0 0
      %540 = vmatpush1.bf16.msra.mxu0 %v516
      %541 = vmatprep.subr.bf16.mxu0 0
      %542 = vmatpush1.bf16.msra.mxu0 0
      %543 = vmatprep.subr.bf16.mxu0 0
      %544 = vmatpush1.bf16.msra.mxu0 0
      %545 = vmatprep.subr.bf16.mxu0 0
      %546 = vmatpush1.bf16.msra.mxu0 0
      %547 = vmatprep.subr.bf16.mxu0 0
      %548 = vmatpush1.bf16.msra.mxu0 0
      %549 = vmatprep.subr.bf16.mxu0 0
      %550 = vmatpush1.bf16.msra.mxu0 0
      %551 = vmatprep.subr.bf16.mxu0 0
      %552 = vmatpush1.bf16.msra.mxu0 0
      %553 = vmatprep.subr.bf16.mxu0 0
      %554 = vmatpush1.bf16.msra.mxu0 0
      %555 = vmatprep.subr.bf16.mxu0 0
      %556 = vmatpush1.bf16.msra.mxu0 0
      %557 = vmatprep.mubr.bf16.mxu0 0
      %558 = vmatmul.mubr.bf16.gmra.mrb[0].mxu0 %v453
      %v559 = vpop.f32.mrb[0].mxu0
      %v560 = vadd.f32 %v475, %v559
      %v561 = vpop.f32.mrb[0].mxu0
      %v562 = vpop.f32.mrb[0].mxu0
      %v563 = vadd.f32 %v475, %v562
      %v564 = vpop.f32.mrb[0].mxu0
      %565 = vdwg.mxu0
      %vm566 = vcmp.gt.f32.partialorder %v560, 0.0
      %vm567 = vcmp.gt.f32.partialorder %v563, 0.0
      %v568 = vsel %vm566, 1, 0
      %v569 = vsel %vm567, 1, 0
      %v570 = vcvt.s32.f32 %v568
      %v571 = vcvt.s32.f32 %v569
      %572 = vst [vmem:[#allocation9] sm:$0xff] %v570
      %573 = vst [vmem:[#allocation9 + $0x8] sm:$0xff] %v571
    $region41: #{tpu_custom_call.1} parent=1 // pred_fallthru
      _
    // Predicated region
    $region42: #{tpu_custom_call.1} parent=1 // pred_check
      _
    $region43: #{tpu_custom_call.1} parent=1 // pred_check_branch
      %575 = sbr.rel (0) target = $region45
    $region44: #{tpu_custom_call.1} parent=1 // pred_region
      %s577 = ssub.s32 256, 256
      %578 = vsyncadd [#allocation5], %s577
      %s579 = sshll.u32 [#allocation9], 4
      %s580 = int_to_ptr.vmem [resolvable:$true] %s579
      %585 = dma.vmem_to_hbm [thread:$0]  %s580, 256, %s5, [#allocation5], 128, 128, 8
    $region45: #{tpu_custom_call.1} parent=1 // pred_fallthru
      _
    // Predicated region
    $region46: #{tpu_custom_call.1} parent=1 // pred_check
      _
    $region47: #{tpu_custom_call.1} parent=1 // pred_check_branch
      %587 = sbr.rel (0) target = $region49
    $region48: #{tpu_custom_call.1} parent=1 // pred_region
      %588 = dma.done [#allocation5], 256
    $region49: #{tpu_custom_call.1} parent=1 // pred_fallthru
      _
    %589 = vsyncpa [#allocation4], 1
    %590 = vsyncpa [#allocation7], 1
    %591 = vsyncpa [#allocation5], 1

</llo_original>
